<compile_context>
chip_gen: v5e
topology: v5e:2x2
jax: 0.10.0
libtpu: 0.0.40
codegen_flags: <defaults>
</compile_context>

<pallas_src>
import jax
import jax.numpy as jnp
from jax.experimental import pallas as pl
from jax.experimental.pallas import tpu as pltpu


NEG_SLOPE = 0.01  # torch.nn.LeakyReLU default


def _leaky(x):
    return jnp.where(x >= 0, x, NEG_SLOPE * x)


def _round_up(x, m):
    return ((x + m - 1) // m) * m


def _vmem_limit_bytes():
    """Generation-aware scoped-VMEM budget (~72% of per-core physical VMEM)."""
    cap = 64 * 1024 * 1024  # conservative fallback = v7x per-TC VMEM
    try:
        cap = int(getattr(pltpu.get_tpu_info(), "vmem_capacity_bytes", cap))
    except Exception:
        pass
    return max(32 * 1024 * 1024, int(0.72 * cap))


def _choose_tiles(n, vmem_limit, max_c):
    """Largest square tile (multiple of 128) whose K-tiled working set fits
    comfortably inside the VMEM budget.  Pads N so the row-tile count is even
    (balanced across the two v7x TensorCores) whenever >1 row tile exists."""
    base = _round_up(max(n, 1), 128)
    tile = 128
    for cand in (1024, 512, 256, 128):
        if cand > base:
            continue
        # double-buffered A tile + double-buffered M tile + f32 accumulator
        est = 2 * (cand * cand * 2) + 2 * (cand * max_c * 2) + cand * max_c * 4
        if est * 4 <= vmem_limit:  # generous headroom for outputs / compiler scratch
            tile = cand
            break
    n_pad = _round_up(base, tile)
    n_tiles = n_pad // tile
    if n_tiles > 1 and n_tiles % 2 == 1:
        n_pad += tile
    return tile, n_pad


# --------------------------------------------------------------------------
# Kernel 1: one SignedGCNConv layer, 2-D tiled (row tile i, contraction tile k).
#   a_ref  : [TM, TK] bf16  adjacency tile (target x source)
#   m_ref  : [TK, C ] bf16  pre-projected node features (H @ W already applied)
#   b_ref  : [1,  C ] f32   conv bias
#   wn_ref : [C, Co ] f32   (fused variant only) next layer's lin weight
#   o_ref  : [TM, Co] bf16  LeakyReLU(sum_k A_ik @ M_k + b) [@ Wn]
#   acc_ref: [TM, C ] f32   VMEM accumulator, resident across the k axis
# --------------------------------------------------------------------------
def _conv_kernel(a_ref, m_ref, b_ref, o_ref, acc_ref):
    k = pl.program_id(1)

    @pl.when(k == 0)
    def _():
        acc_ref[...] = jnp.zeros_like(acc_ref)

    acc_ref[...] += jnp.dot(a_ref[...], m_ref[...],
                            preferred_element_type=jnp.float32)

    @pl.when(k == pl.num_programs(1) - 1)
    def _():
        o_ref[...] = _leaky(acc_ref[...] + b_ref[...]).astype(o_ref.dtype)


def _conv_fused_kernel(a_ref, m_ref, b_ref, wn_ref, o_ref, acc_ref):
    k = pl.program_id(1)

    @pl.when(k == 0)
    def _():
        acc_ref[...] = jnp.zeros_like(acc_ref)

    acc_ref[...] += jnp.dot(a_ref[...], m_ref[...],
                            preferred_element_type=jnp.float32)

    @pl.when(k == pl.num_programs(1) - 1)
    def _():
        h = _leaky(acc_ref[...] + b_ref[...])
        o_ref[...] = jnp.dot(h, wn_ref[...],
                             preferred_element_type=jnp.float32).astype(o_ref.dtype)


def signed_conv(a_bf16, m_bf16, bias, w_next=None, *, tile, vmem_limit,
                out_dtype=jnp.bfloat16):
    n_pad = a_bf16.shape[0]
    c = m_bf16.shape[1]
    co = c if w_next is None else w_next.shape[1]
    grid = (n_pad // tile, n_pad // tile)

    in_specs = [
        pl.BlockSpec((tile, tile), lambda i, k: (i, k)),  # A tile (bf16 stream)
        pl.BlockSpec((tile, c),    lambda i, k: (k, 0)),  # pre-projected features
        pl.BlockSpec((1, c),       lambda i, k: (0, 0)),  # conv bias
    ]
    operands = [a_bf16, m_bf16, bias]
    kernel = _conv_kernel
    flops = 2 * n_pad * n_pad * c
    if w_next is not None:
        in_specs.append(pl.BlockSpec((c, co), lambda i, k: (0, 0)))
        operands.append(w_next)
        kernel = _conv_fused_kernel
        flops += 2 * n_pad * c * co

    bytes_accessed = (n_pad * n_pad * 2                      # A stream
                      + (n_pad // tile) * n_pad * c * 2      # M re-streamed per row tile
                      + n_pad * co * jnp.dtype(out_dtype).itemsize)

    return pl.pallas_call(
        kernel,
        out_shape=jax.ShapeDtypeStruct((n_pad, co), out_dtype),
        grid_spec=pltpu.PrefetchScalarGridSpec(
            num_scalar_prefetch=0,
            grid=grid,
            in_specs=in_specs,
            out_specs=pl.BlockSpec((tile, co), lambda i, k: (i, 0)),
            scratch_shapes=[pltpu.VMEM((tile, c), jnp.float32)],
        ),
        compiler_params=pltpu.CompilerParams(
            dimension_semantics=("parallel", "arbitrary"),  # rows split / K accumulated
            vmem_limit_bytes=vmem_limit,
        ),
        cost_estimate=pl.CostEstimate(flops=int(flops), transcendentals=0,
                                      bytes_accessed=int(bytes_accessed)),
    )(*operands)


# --------------------------------------------------------------------------
# Kernel 2: global_mean_pool + Linear head, tiled over N with a VMEM
# accumulator (pl.when init / finalize).  Axis MUST stay "arbitrary".
#   p_ref : [G,  TM]  f32   mean-pool matrix column tile
#   h_ref : [TM, Co]  bf16  node-feature row tile (layer-2 output)
#   wm/bm : [Co, 2], [1, 2] f32
#   o_ref : [G, 2]    f32
# --------------------------------------------------------------------------
def _pool_head_kernel(p_ref, h_ref, wm_ref, bm_ref, o_ref, acc_ref):
    i = pl.program_id(0)

    @pl.when(i == 0)
    def _():
        acc_ref[...] = jnp.zeros_like(acc_ref)

    acc_ref[...] += jnp.dot(p_ref[...], h_ref[...].astype(jnp.float32),
                            preferred_element_type=jnp.float32)

    @pl.when(i == pl.num_programs(0) - 1)
    def _():
        o_ref[...] = (jnp.dot(acc_ref[...], wm_ref[...],
                              preferred_element_type=jnp.float32) + bm_ref[...])


def pool_and_head(pool_mat, h, wm, bm, *, tile, vmem_limit):
    g, n_pad = pool_mat.shape
    co = h.shape[1]
    n_out = wm.shape[1]
    grid = (n_pad // tile,)

    return pl.pallas_call(
        _pool_head_kernel,
        out_shape=jax.ShapeDtypeStruct((g, n_out), jnp.float32),
        grid_spec=pltpu.PrefetchScalarGridSpec(
            num_scalar_prefetch=0,
            grid=grid,
            in_specs=[
                pl.BlockSpec((g, tile),   lambda i: (0, i)),
                pl.BlockSpec((tile, co),  lambda i: (i, 0)),
                pl.BlockSpec((co, n_out), lambda i: (0, 0)),
                pl.BlockSpec((1, n_out),  lambda i: (0, 0)),
            ],
            out_specs=pl.BlockSpec((g, n_out), lambda i: (0, 0)),
            scratch_shapes=[pltpu.VMEM((g, co), jnp.float32)],
        ),
        compiler_params=pltpu.CompilerParams(
            dimension_semantics=("arbitrary",),  # shared accumulator across tiles
            vmem_limit_bytes=vmem_limit,
        ),
    )(pool_mat, h, wm, bm)


# --------------------------------------------------------------------------
# Full forward: JAX glue (degrees / dense bf16 A / pooling matrix / padding)
# + the two Pallas hot paths above.
# --------------------------------------------------------------------------
def signed_gcn_forward(params, x, edge_index, edge_weight, batch, num_graphs):
    w1, b1, w2, b2, wm, bm = params
    n = x.shape[0]
    row = edge_index[0]  # source nodes (j)
    col = edge_index[1]  # target nodes (i)

    vmem_limit = _vmem_limit_bytes()
    max_c = max(x.shape[1], w1.shape[1], w2.shape[1])
    tile, n_pad = _choose_tiles(n, vmem_limit, max_c)

    # deg = scatter_add(|w|, row) ; deg^-1/2 with inf -> 0   (plain JAX scatter)
    deg = jnp.zeros((n,), jnp.float32).at[row].add(jnp.abs(edge_weight))
    deg_inv_sqrt = jnp.where(deg > 0, jax.lax.rsqrt(deg), 0.0)
    norm = deg_inv_sqrt[row] * deg_inv_sqrt[col]

    # Dense normalized operator (target x source), built DIRECTLY in bf16
    # (no intermediate f32 [N_pad, N_pad] materialization + cast pass).
    a_bf16 = (jnp.zeros((n_pad, n_pad), jnp.bfloat16)
              .at[col, row].add(norm.astype(jnp.bfloat16)))

    # Layer 1 operand: projection folded out of the kernel (tiny [N,Ci]@[Ci,Hid]).
    m1 = jnp.zeros((n_pad, w1.shape[1]), jnp.float32).at[:n].set(x @ w1)
    m1 = m1.astype(jnp.bfloat16)

    # Layer 1: finalize applies bias + LeakyReLU and immediately projects by W2,
    # emitting layer-2's pre-projected bf16 operand (f32 accumulation throughout).
    m2 = signed_conv(a_bf16, m1, b1, w_next=w2, tile=tile,
                     vmem_limit=vmem_limit, out_dtype=jnp.bfloat16)

    # Layer 2: pure A @ M2 + b2 stream, bf16 output for the pool kernel.
    h2 = signed_conv(a_bf16, m2, b2, tile=tile,
                     vmem_limit=vmem_limit, out_dtype=jnp.bfloat16)

    # Mean-pool matrix P[g, v] = 1/count_g if batch[v] == g, zero-padded cols.
    one_hot = (batch[None, :] == jnp.arange(num_graphs)[:, None]).astype(jnp.float32)
    counts = jnp.maximum(one_hot.sum(axis=1, keepdims=True), 1.0)
    pool = jnp.zeros((num_graphs, n_pad), jnp.float32).at[:, :n].set(one_hot / counts)

    return pool_and_head(pool, h2, wm, bm, tile=tile, vmem_limit=vmem_limit)


# --------------------------------------------------------------------------
# Pure-JAX f32 reference mirroring the PyTorch semantics.
# --------------------------------------------------------------------------
def reference_forward(params, x, edge_index, edge_weight, batch, num_graphs):
    w1, b1, w2, b2, wm, bm = params
    n = x.shape[0]
    row, col = edge_index[0], edge_index[1]
    deg = jnp.zeros((n,), jnp.float32).at[row].add(jnp.abs(edge_weight))
    dis = jnp.where(deg > 0, 1.0 / jnp.sqrt(deg), 0.0)
    norm = dis[row] * dis[col]

    def conv(h, w, b):
        h = h @ w
        msg = norm[:, None] * h[row]                                     # message
        out = jnp.zeros((n, h.shape[1]), jnp.float32).at[col].add(msg)   # aggr='add'
        return out + b

    h = _leaky(conv(x, w1, b1))
    h = _leaky(conv(h, w2, b2))
    one_hot = (batch[None, :] == jnp.arange(num_graphs)[:, None]).astype(jnp.float32)
    pooled = (one_hot @ h) / jnp.maximum(one_hot.sum(1, keepdims=True), 1.0)
    return pooled @ wm + bm


def init_params(key, in_channels, hid_channels, out_channels):
    """Deterministic parameter init (shapes follow the PyTorch module)."""
    k1, k2, k3, k4 = jax.random.split(key, 4)

    def kaiming_uniform(k, fan_in, shape):
        bound = 1.0 / jnp.sqrt(fan_in)
        return jax.random.uniform(k, shape, jnp.float32, -bound, bound)

    # SignedGCNConv.lin weights (stored transposed: [in, out]); conv bias = 0.
    w1 = kaiming_uniform(k1, in_channels, (in_channels, hid_channels))
    b1 = jnp.zeros((1, hid_channels), jnp.float32)
    w2 = kaiming_uniform(k2, hid_channels, (hid_channels, out_channels))
    b2 = jnp.zeros((1, out_channels), jnp.float32)
    # mlp: Linear(out_channels, 2) with bias.
    wm = kaiming_uniform(k3, out_channels, (out_channels, 2))
    bm = kaiming_uniform(k4, out_channels, (1, 2))
    return (w1, b1, w2, b2, wm, bm)


if __name__ == "__main__":
    key = jax.random.PRNGKey(0)
    k_param, k_x, k_w1, k_w2 = jax.random.split(key, 4)

    in_channels, hid_channels, out_channels = 4, 32, 16
    num_nodes, num_graphs = 8, 2

    params = init_params(k_param, in_channels, hid_channels, out_channels)

    # Small 2-graph batch: nodes 0..3 -> graph 0, nodes 4..7 -> graph 1.
    x = jax.random.normal(k_x, (num_nodes, in_channels), jnp.float32)
    src = jnp.array([0, 1, 1, 2, 2, 3, 3, 0, 4, 5, 5, 6, 6, 7, 7, 4], jnp.int32)
    dst = jnp.array([1, 0, 2, 1, 3, 2, 0, 3, 5, 4, 6, 5, 7, 6, 4, 7], jnp.int32)
    edge_index = jnp.stack([src, dst], axis=0)
    # Signed weights with magnitude in [0.5, 1.5] (well-conditioned degrees).
    mag = jax.random.uniform(k_w1, (src.shape[0],), jnp.float32, 0.5, 1.5)
    sgn = jnp.where(jax.random.uniform(k_w2, (src.shape[0],)) < 0.5, -1.0, 1.0)
    edge_weight = mag * sgn
    batch = jnp.array([0, 0, 0, 0, 1, 1, 1, 1], jnp.int32)

    out = signed_gcn_forward(params, x, edge_index, edge_weight, batch, num_graphs)
    out = jax.block_until_ready(out)

    ref = reference_forward(params, x, edge_index, edge_weight, batch, num_graphs)
    assert out.shape == (num_graphs, 2)
    # bf16 A / intermediates (intentional, per perf review) -> loosened tolerance.
    assert jnp.allclose(out, ref, atol=5e-2, rtol=5e-2), (out, ref)

    print("KERNEL_OK")
</pallas_src>

<mosaic_0001>
module attributes {stable_mosaic.version = 11 : i64} {
  func.func @_conv_fused_kernel(%arg0: i32, %arg1: i32, %arg2: memref<128x128xbf16, #tpu.memory_space<vmem>>, %arg3: memref<128x32xbf16, #tpu.memory_space<vmem>>, %arg4: memref<1x32xf32, #tpu.memory_space<vmem>>, %arg5: memref<32x16xf32, #tpu.memory_space<vmem>>, %arg6: memref<128x16xbf16, #tpu.memory_space<vmem>>, %arg7: memref<128x32xf32, #tpu.memory_space<vmem>>) attributes {dimension_semantics = [#tpu.dimension_semantics<parallel>, #tpu.dimension_semantics<arbitrary>], iteration_bounds = array<i64: 1, 1>, scalar_prefetch = 0 : i64, scratch_operands = 1 : i64, tpu.core_type = #tpu.core_type<tc>, window_params = [{transform_indices = @transform_0, window_bounds = array<i64: 128, 128>}, {transform_indices = @transform_1, window_bounds = array<i64: 128, 32>}, {pipeline_mode = #tpu.pipeline_mode<synchronous>, transform_indices = @transform_2, window_bounds = array<i64: 1, 32>}, {pipeline_mode = #tpu.pipeline_mode<synchronous>, transform_indices = @transform_3, window_bounds = array<i64: 32, 16>}, {transform_indices = @transform_4, window_bounds = array<i64: 128, 16>}]} {
    %c0_i32 = arith.constant 0 : i32
    %0 = arith.cmpi eq, %arg1, %c0_i32 : i32
    %1 = arith.extui %0 : i1 to i32
    %c0_i32_0 = arith.constant 0 : i32
    %2 = arith.cmpi ne, %1, %c0_i32_0 : i32
    scf.if %2 {
      %cst_10 = arith.constant 0.000000e+00 : f32
      %12 = vector.broadcast %cst_10 : f32 to vector<128x32xf32>
      %c0_11 = arith.constant 0 : index
      %c0_12 = arith.constant 0 : index
      %13 = vector.load %arg7[%c0_11, %c0_12] : memref<128x32xf32, #tpu.memory_space<vmem>>, vector<128x32xf32>
      tpu.vector_store %arg7[%c0_11, %c0_12], %12 {strides = array<i32>} : memref<128x32xf32, #tpu.memory_space<vmem>>, vector<128x32xf32>,
    } else {
    }
    %c0 = arith.constant 0 : index
    %c0_1 = arith.constant 0 : index
    %3 = vector.load %arg7[%c0, %c0_1] : memref<128x32xf32, #tpu.memory_space<vmem>>, vector<128x32xf32>
    %c0_2 = arith.constant 0 : index
    %c0_3 = arith.constant 0 : index
    %4 = vector.load %arg2[%c0_2, %c0_3] : memref<128x128xbf16, #tpu.memory_space<vmem>>, vector<128x128xbf16>
    %c0_4 = arith.constant 0 : index
    %c0_5 = arith.constant 0 : index
    %5 = vector.load %arg3[%c0_4, %c0_5] : memref<128x32xbf16, #tpu.memory_space<vmem>>, vector<128x32xbf16>
    %cst = arith.constant dense<0.000000e+00> : vector<128x32xf32>
    %6 = tpu.matmul %4, %5, %cst {dimension_numbers = #tpu.dot_dimension_numbers<[1], [0], [0], [1], [0, 0, 1, 1], [], []>} : vector<128x128xbf16>, vector<128x32xbf16>, vector<128x32xf32> -> vector<128x32xf32>
    %7 = arith.addf %3, %6 : vector<128x32xf32>
    %c0_6 = arith.constant 0 : index
    %c0_7 = arith.constant 0 : index
    %8 = vector.load %arg7[%c0_6, %c0_7] : memref<128x32xf32, #tpu.memory_space<vmem>>, vector<128x32xf32>
    tpu.vector_store %arg7[%c0_6, %c0_7], %7 {strides = array<i32>} : memref<128x32xf32, #tpu.memory_space<vmem>>, vector<128x32xf32>,
    %c0_i32_8 = arith.constant 0 : i32
    %9 = arith.cmpi eq, %arg1, %c0_i32_8 : i32
    %10 = arith.extui %9 : i1 to i32
    %c0_i32_9 = arith.constant 0 : i32
    %11 = arith.cmpi ne, %10, %c0_i32_9 : i32
    scf.if %11 {
      %c0_10 = arith.constant 0 : index
      %c0_11 = arith.constant 0 : index
      %12 = vector.load %arg7[%c0_10, %c0_11] : memref<128x32xf32, #tpu.memory_space<vmem>>, vector<128x32xf32>
      %c0_12 = arith.constant 0 : index
      %c0_13 = arith.constant 0 : index
      %13 = vector.load %arg4[%c0_12, %c0_13] : memref<1x32xf32, #tpu.memory_space<vmem>>, vector<1x32xf32>
      %14 = vector.broadcast %13 : vector<1x32xf32> to vector<128x32xf32>
      %15 = arith.addf %12, %14 : vector<128x32xf32>
      %cst_14 = arith.constant 0.000000e+00 : f32
      %16 = vector.broadcast %cst_14 : f32 to vector<128x32xf32>
      %17 = arith.cmpf oge, %15, %16 : vector<128x32xf32>
      %cst_15 = arith.constant 0.00999999977 : f32
      %18 = vector.broadcast %cst_15 : f32 to vector<128x32xf32>
      %19 = arith.mulf %18, %15 : vector<128x32xf32>
      %20 = arith.select %17, %15, %19 : vector<128x32xi1>, vector<128x32xf32>
      %c0_16 = arith.constant 0 : index
      %c0_17 = arith.constant 0 : index
      %21 = vector.load %arg5[%c0_16, %c0_17] : memref<32x16xf32, #tpu.memory_space<vmem>>, vector<32x16xf32>
      %cst_18 = arith.constant dense<0.000000e+00> : vector<128x16xf32>
      %22 = tpu.matmul %20, %21, %cst_18 {dimension_numbers = #tpu.dot_dimension_numbers<[1], [0], [0], [1], [0, 0, 1, 1], [], []>} : vector<128x32xf32>, vector<32x16xf32>, vector<128x16xf32> -> vector<128x16xf32>
      %23 = arith.truncf %22 : vector<128x16xf32> to vector<128x16xbf16>
      %c0_19 = arith.constant 0 : index
      %c0_20 = arith.constant 0 : index
      %24 = vector.load %arg6[%c0_19, %c0_20] : memref<128x16xbf16, #tpu.memory_space<vmem>>, vector<128x16xbf16>
      tpu.vector_store %arg6[%c0_19, %c0_20], %23 {strides = array<i32>} : memref<128x16xbf16, #tpu.memory_space<vmem>>, vector<128x16xbf16>,
    } else {
    }
    return
  }
  func.func @transform_0(%arg0: i32, %arg1: i32) -> (i32, i32) {
    %c0_i32 = arith.constant 0 : i32
    return %arg0, %arg1 : i32, i32
  }
  func.func @transform_1(%arg0: i32, %arg1: i32) -> (i32, i32) {
    %c0_i32 = arith.constant 0 : i32
    %c0_i32_0 = arith.constant 0 : i32
    return %arg1, %c0_i32 : i32, i32
  }
  func.func @transform_2(%arg0: i32, %arg1: i32) -> (i32, i32) {
    %c0_i32 = arith.constant 0 : i32
    %c0_i32_0 = arith.constant 0 : i32
    %c0_i32_1 = arith.constant 0 : i32
    return %c0_i32, %c0_i32_0 : i32, i32
  }
  func.func @transform_3(%arg0: i32, %arg1: i32) -> (i32, i32) {
    %c0_i32 = arith.constant 0 : i32
    %c0_i32_0 = arith.constant 0 : i32
    %c0_i32_1 = arith.constant 0 : i32
    return %c0_i32, %c0_i32_0 : i32, i32
  }
  func.func @transform_4(%arg0: i32, %arg1: i32) -> (i32, i32) {
    %c0_i32 = arith.constant 0 : i32
    %c0_i32_0 = arith.constant 0 : i32
    return %arg0, %c0_i32 : i32, i32
  }
}

</mosaic_0001>

<llo_original>
// kernel: tpu_custom_call.1
$region0: #{tpu_custom_call.1}
  #allocation0 [shape = 'u32[]', space=smem, size = 0x4, offset = 0x4, fixed_abs, tag = 'smem constant byte address 0x4 - core index']
  #allocation1 [shape = 'u32[72,128]{1,0:T(1,128)}', space=vmem, size = 0x9000, scoped, tag = 'internal scratch']
  #allocation2 [shape = 'f32[128,32]{1,0:T(8,128)}', space=vmem, size = 0x10000, scoped, tag = 'scratch operand']
  %s0 = inlined_call_operand.vmem [shape: bf16[128,128], index: 0, kind: input, shape index: {}]
  %s1 = inlined_call_operand.vmem [shape: bf16[128,32], index: 1, kind: input, shape index: {}]
  %s2 = inlined_call_operand.vmem [shape: f32[1,32], index: 2, kind: input, shape index: {}]
  %s3 = inlined_call_operand.vmem [shape: f32[32,16], index: 3, kind: input, shape index: {}]
  %s4 = inlined_call_operand.vmem [shape: bf16[128,16], index: 4, kind: output, shape index: {}]
  %s5 = sld [smem:[#allocation0]]
  $region34: #{tpu_custom_call.1} parent=0
    _
  %s7 = ssub.s32 1, %s5
  %s8 = scalar_select 0, %s7, %s5
  // Predicated region
  $region2: #{tpu_custom_call.1} parent=0 // pred_check
    _
  $region3: #{tpu_custom_call.1} parent=0 // pred_check_branch
    %10 = sbr.rel (0) target = $region5
  $region4: #{tpu_custom_call.1} parent=0 // pred_region
    _
  $region5: #{tpu_custom_call.1} parent=0 // pred_fallthru
    _
  // Predicated region
  $region6: #{tpu_custom_call.1} parent=0 // pred_check
    _
  $region7: #{tpu_custom_call.1} parent=0 // pred_check_branch
    %12 = sbr.rel (0) target = $region9
  $region8: #{tpu_custom_call.1} parent=0 // pred_region
    _
  $region9: #{tpu_custom_call.1} parent=0 // pred_fallthru
    _
  // Predicated region
  $region10: #{tpu_custom_call.1} parent=0 // pred_check
    _
  $region11: #{tpu_custom_call.1} parent=0 // pred_check_branch
    %14 = sbr.rel (0) target = $region13
  $region12: #{tpu_custom_call.1} parent=0 // pred_region
    _
  $region13: #{tpu_custom_call.1} parent=0 // pred_fallthru
    _
  // Predicated region
  $region14: #{tpu_custom_call.1} parent=0 // pred_check
    _
  $region15: #{tpu_custom_call.1} parent=0 // pred_check_branch
    %16 = sbr.rel (0) target = $region17
  $region16: #{tpu_custom_call.1} parent=0 // pred_region
    _
  $region17: #{tpu_custom_call.1} parent=0 // pred_fallthru
    _
  %p17 = scmp.eq.s32.totalorder 0, 0
  // Predicated region
  $region18: #{tpu_custom_call.1} parent=0 // pred_check
    %p18 = pneg %p17
  $region19: #{tpu_custom_call.1} parent=0 // pred_check_branch
    %20 = sbr.rel (%p18) target = $region21
  $region20: #{tpu_custom_call.1} parent=0 // pred_region
    %vm21 = vcmask 261120
    %22 = vst.msk [vmem:[#allocation2] sm:$0xff] %vm21, 0.0
    %23 = vst.msk [vmem:[#allocation2 + $0x8] sm:$0xff] %vm21, 0.0
    %24 = vst.msk [vmem:[#allocation2 + $0x10] sm:$0xff] %vm21, 0.0
    %25 = vst.msk [vmem:[#allocation2 + $0x18] sm:$0xff] %vm21, 0.0
    %26 = vst.msk [vmem:[#allocation2 + $0x20] sm:$0xff] %vm21, 0.0
    %27 = vst.msk [vmem:[#allocation2 + $0x28] sm:$0xff] %vm21, 0.0
    %28 = vst.msk [vmem:[#allocation2 + $0x30] sm:$0xff] %vm21, 0.0
    %29 = vst.msk [vmem:[#allocation2 + $0x38] sm:$0xff] %vm21, 0.0
    %30 = vst.msk [vmem:[#allocation2 + $0x40] sm:$0xff] %vm21, 0.0
    %31 = vst.msk [vmem:[#allocation2 + $0x48] sm:$0xff] %vm21, 0.0
    %32 = vst.msk [vmem:[#allocation2 + $0x50] sm:$0xff] %vm21, 0.0
    %33 = vst.msk [vmem:[#allocation2 + $0x58] sm:$0xff] %vm21, 0.0
    %34 = vst.msk [vmem:[#allocation2 + $0x60] sm:$0xff] %vm21, 0.0
    %35 = vst.msk [vmem:[#allocation2 + $0x68] sm:$0xff] %vm21, 0.0
    %36 = vst.msk [vmem:[#allocation2 + $0x70] sm:$0xff] %vm21, 0.0
    %37 = vst.msk [vmem:[#allocation2 + $0x78] sm:$0xff] %vm21, 0.0
  $region21: #{tpu_custom_call.1} parent=0 // pred_fallthru
    _
  %v38 = vld [vmem:[#allocation2] sm:$0xff]
  %v39 = vld [vmem:[#allocation2 + $0x8] sm:$0xff]
  %v40 = vld [vmem:[#allocation2 + $0x10] sm:$0xff]
  %v41 = vld [vmem:[#allocation2 + $0x18] sm:$0xff]
  %v42 = vld [vmem:[#allocation2 + $0x20] sm:$0xff]
  %v43 = vld [vmem:[#allocation2 + $0x28] sm:$0xff]
  %v44 = vld [vmem:[#allocation2 + $0x30] sm:$0xff]
  %v45 = vld [vmem:[#allocation2 + $0x38] sm:$0xff]
  %v46 = vld [vmem:[#allocation2 + $0x40] sm:$0xff]
  %v47 = vld [vmem:[#allocation2 + $0x48] sm:$0xff]
  %v48 = vld [vmem:[#allocation2 + $0x50] sm:$0xff]
  %v49 = vld [vmem:[#allocation2 + $0x58] sm:$0xff]
  %v50 = vld [vmem:[#allocation2 + $0x60] sm:$0xff]
  %v51 = vld [vmem:[#allocation2 + $0x68] sm:$0xff]
  %v52 = vld [vmem:[#allocation2 + $0x70] sm:$0xff]
  %v53 = vld [vmem:[#allocation2 + $0x78] sm:$0xff]
  %v54 = vld [vmem:[%s0] sm:$0xf]
  %v55 = vld [vmem:[%s0 + $0x4] sm:$0xf]
  %v56 = vld [vmem:[%s0 + $0x8] sm:$0xf]
  %v57 = vld [vmem:[%s0 + $0xc] sm:$0xf]
  %v58 = vld [vmem:[%s0 + $0x10] sm:$0xf]
  %v59 = vld [vmem:[%s0 + $0x14] sm:$0xf]
  %v60 = vld [vmem:[%s0 + $0x18] sm:$0xf]
  %v61 = vld [vmem:[%s0 + $0x1c] sm:$0xf]
  %v62 = vld [vmem:[%s0 + $0x20] sm:$0xf]
  %v63 = vld [vmem:[%s0 + $0x24] sm:$0xf]
  %v64 = vld [vmem:[%s0 + $0x28] sm:$0xf]
  %v65 = vld [vmem:[%s0 + $0x2c] sm:$0xf]
  %v66 = vld [vmem:[%s0 + $0x30] sm:$0xf]
  %v67 = vld [vmem:[%s0 + $0x34] sm:$0xf]
  %v68 = vld [vmem:[%s0 + $0x38] sm:$0xf]
  %v69 = vld [vmem:[%s0 + $0x3c] sm:$0xf]
  %v70 = vld [vmem:[%s1] sm:$0xf]
  %v71 = vld [vmem:[%s1 + $0x4] sm:$0xf]
  %v72 = vld [vmem:[%s1 + $0x8] sm:$0xf]
  %v73 = vld [vmem:[%s1 + $0xc] sm:$0xf]
  %v74 = vld [vmem:[%s1 + $0x10] sm:$0xf]
  %v75 = vld [vmem:[%s1 + $0x14] sm:$0xf]
  %v76 = vld [vmem:[%s1 + $0x18] sm:$0xf]
  %v77 = vld [vmem:[%s1 + $0x1c] sm:$0xf]
  %v78 = vld [vmem:[%s1 + $0x20] sm:$0xf]
  %v79 = vld [vmem:[%s1 + $0x24] sm:$0xf]
  %v80 = vld [vmem:[%s1 + $0x28] sm:$0xf]
  %v81 = vld [vmem:[%s1 + $0x2c] sm:$0xf]
  %v82 = vld [vmem:[%s1 + $0x30] sm:$0xf]
  %v83 = vld [vmem:[%s1 + $0x34] sm:$0xf]
  %v84 = vld [vmem:[%s1 + $0x38] sm:$0xf]
  %v85 = vld [vmem:[%s1 + $0x3c] sm:$0xf]
  %v102 = vunpack.c.l.b16 %v54
  %v103 = vunpack.c.l.b16 %v55
  %v104 = vunpack.c.l.b16 %v56
  %v105 = vunpack.c.l.b16 %v57
  %v106 = vunpack.c.l.b16 %v58
  %v107 = vunpack.c.l.b16 %v59
  %v108 = vunpack.c.l.b16 %v60
  %v109 = vunpack.c.l.b16 %v61
  %v110 = vunpack.c.l.b16 %v62
  %v111 = vunpack.c.l.b16 %v63
  %v112 = vunpack.c.l.b16 %v64
  %v113 = vunpack.c.l.b16 %v65
  %v114 = vunpack.c.l.b16 %v66
  %v115 = vunpack.c.l.b16 %v67
  %v116 = vunpack.c.l.b16 %v68
  %v117 = vunpack.c.l.b16 %v69
  %v118 = vpack.c.b16 %v103, %v102
  %v119 = vpack.c.b16 %v105, %v104
  %v120 = vpack.c.b16 %v107, %v106
  %v121 = vpack.c.b16 %v109, %v108
  %v122 = vpack.c.b16 %v111, %v110
  %v123 = vpack.c.b16 %v113, %v112
  %v124 = vpack.c.b16 %v115, %v114
  %v125 = vpack.c.b16 %v117, %v116
  %v150 = vunpack.c.l.b16 %v70
  %v151 = vunpack.c.l.b16 %v71
  %v152 = vunpack.c.l.b16 %v72
  %v153 = vunpack.c.l.b16 %v73
  %v154 = vunpack.c.l.b16 %v74
  %v155 = vunpack.c.l.b16 %v75
  %v156 = vunpack.c.l.b16 %v76
  %v157 = vunpack.c.l.b16 %v77
  %v158 = vunpack.c.l.b16 %v78
  %v159 = vunpack.c.l.b16 %v79
  %v160 = vunpack.c.l.b16 %v80
  %v161 = vunpack.c.l.b16 %v81
  %v162 = vunpack.c.l.b16 %v82
  %v163 = vunpack.c.l.b16 %v83
  %v164 = vunpack.c.l.b16 %v84
  %v165 = vunpack.c.l.b16 %v85
  %v166 = vpack.c.b16 %v151, %v150
  %v167 = vpack.c.b16 %v153, %v152
  %v168 = vpack.c.b16 %v155, %v154
  %v169 = vpack.c.b16 %v157, %v156
  %v170 = vpack.c.b16 %v159, %v158
  %v171 = vpack.c.b16 %v161, %v160
  %v172 = vpack.c.b16 %v163, %v162
  %v173 = vpack.c.b16 %v165, %v164
  %182 = vmatpush.bf16.msra.mxu0 %v173
  %183 = vmatpush.bf16.msra.mxu0 %v172
  %184 = vmatpush.bf16.msra.mxu0 %v171
  %185 = vmatpush.bf16.msra.mxu0 %v170
  %186 = vmatpush.bf16.msra.mxu0 %v169
  %187 = vmatpush.bf16.msra.mxu0 %v168
  %188 = vmatpush.bf16.msra.mxu0 %v167
  %189 = vmatpush.bf16.msra.mxu0 %v166
  %190 = vmatmul.bf16.gmra.mxu0 %v118
  %v191 = vpop.f32.mrf.mxu0
  %v192 = vadd.f32 0.0, %v191
  %v193 = vpop.f32.mrf.mxu0
  %v194 = vadd.f32 0.0, %v193
  %195 = vmatmul.bf16.gmra.mxu0 %v119
  %v196 = vpop.f32.mrf.mxu0
  %v197 = vadd.f32 0.0, %v196
  %v198 = vpop.f32.mrf.mxu0
  %v199 = vadd.f32 0.0, %v198
  %200 = vmatmul.bf16.gmra.mxu0 %v120
  %v201 = vpop.f32.mrf.mxu0
  %v202 = vadd.f32 0.0, %v201
  %v203 = vpop.f32.mrf.mxu0
  %v204 = vadd.f32 0.0, %v203
  %205 = vmatmul.bf16.gmra.mxu0 %v121
  %v206 = vpop.f32.mrf.mxu0
  %v207 = vadd.f32 0.0, %v206
  %v208 = vpop.f32.mrf.mxu0
  %v209 = vadd.f32 0.0, %v208
  %210 = vmatmul.bf16.gmra.mxu0 %v122
  %v211 = vpop.f32.mrf.mxu0
  %v212 = vadd.f32 0.0, %v211
  %v213 = vpop.f32.mrf.mxu0
  %v214 = vadd.f32 0.0, %v213
  %215 = vmatmul.bf16.gmra.mxu0 %v123
  %v216 = vpop.f32.mrf.mxu0
  %v217 = vadd.f32 0.0, %v216
  %v218 = vpop.f32.mrf.mxu0
  %v219 = vadd.f32 0.0, %v218
  %220 = vmatmul.bf16.gmra.mxu0 %v124
  %v221 = vpop.f32.mrf.mxu0
  %v222 = vadd.f32 0.0, %v221
  %v223 = vpop.f32.mrf.mxu0
  %v224 = vadd.f32 0.0, %v223
  %225 = vmatmul.bf16.gmra.mxu0 %v125
  %v226 = vpop.f32.mrf.mxu0
  %v227 = vadd.f32 0.0, %v226
  %v228 = vpop.f32.mrf.mxu0
  %v229 = vadd.f32 0.0, %v228
  %230 = vdwg.mxu0
  %v231 = vadd.f32 %v38, %v192
  %v232 = vadd.f32 %v39, %v194
  %v233 = vadd.f32 %v40, %v197
  %v234 = vadd.f32 %v41, %v199
  %v235 = vadd.f32 %v42, %v202
  %v236 = vadd.f32 %v43, %v204
  %v237 = vadd.f32 %v44, %v207
  %v238 = vadd.f32 %v45, %v209
  %v239 = vadd.f32 %v46, %v212
  %v240 = vadd.f32 %v47, %v214
  %v241 = vadd.f32 %v48, %v217
  %v242 = vadd.f32 %v49, %v219
  %v243 = vadd.f32 %v50, %v222
  %v244 = vadd.f32 %v51, %v224
  %v245 = vadd.f32 %v52, %v227
  %v246 = vadd.f32 %v53, %v229
  %vm247 = vcmask 261120
  %248 = vst.msk [vmem:[#allocation2] sm:$0xff] %vm247, %v231
  %249 = vst.msk [vmem:[#allocation2 + $0x8] sm:$0xff] %vm247, %v232
  %250 = vst.msk [vmem:[#allocation2 + $0x10] sm:$0xff] %vm247, %v233
  %251 = vst.msk [vmem:[#allocation2 + $0x18] sm:$0xff] %vm247, %v234
  %252 = vst.msk [vmem:[#allocation2 + $0x20] sm:$0xff] %vm247, %v235
  %253 = vst.msk [vmem:[#allocation2 + $0x28] sm:$0xff] %vm247, %v236
  %254 = vst.msk [vmem:[#allocation2 + $0x30] sm:$0xff] %vm247, %v237
  %255 = vst.msk [vmem:[#allocation2 + $0x38] sm:$0xff] %vm247, %v238
  %256 = vst.msk [vmem:[#allocation2 + $0x40] sm:$0xff] %vm247, %v239
  %257 = vst.msk [vmem:[#allocation2 + $0x48] sm:$0xff] %vm247, %v240
  %258 = vst.msk [vmem:[#allocation2 + $0x50] sm:$0xff] %vm247, %v241
  %259 = vst.msk [vmem:[#allocation2 + $0x58] sm:$0xff] %vm247, %v242
  %260 = vst.msk [vmem:[#allocation2 + $0x60] sm:$0xff] %vm247, %v243
  %261 = vst.msk [vmem:[#allocation2 + $0x68] sm:$0xff] %vm247, %v244
  %262 = vst.msk [vmem:[#allocation2 + $0x70] sm:$0xff] %vm247, %v245
  %263 = vst.msk [vmem:[#allocation2 + $0x78] sm:$0xff] %vm247, %v246
  // Predicated region
  $region22: #{tpu_custom_call.1} parent=0 // pred_check
    %p264 = pneg %p17
  $region23: #{tpu_custom_call.1} parent=0 // pred_check_branch
    %266 = sbr.rel (%p264) target = $region25
  $region24: #{tpu_custom_call.1} parent=0 // pred_region
    %v267 = vld [vmem:[#allocation2] sm:$0xff]
    %v268 = vld [vmem:[#allocation2 + $0x8] sm:$0xff]
    %v269 = vld [vmem:[#allocation2 + $0x10] sm:$0xff]
    %v270 = vld [vmem:[#allocation2 + $0x18] sm:$0xff]
    %v271 = vld [vmem:[#allocation2 + $0x20] sm:$0xff]
    %v272 = vld [vmem:[#allocation2 + $0x28] sm:$0xff]
    %v273 = vld [vmem:[#allocation2 + $0x30] sm:$0xff]
    %v274 = vld [vmem:[#allocation2 + $0x38] sm:$0xff]
    %v275 = vld [vmem:[#allocation2 + $0x40] sm:$0xff]
    %v276 = vld [vmem:[#allocation2 + $0x48] sm:$0xff]
    %v277 = vld [vmem:[#allocation2 + $0x50] sm:$0xff]
    %v278 = vld [vmem:[#allocation2 + $0x58] sm:$0xff]
    %v279 = vld [vmem:[#allocation2 + $0x60] sm:$0xff]
    %v280 = vld [vmem:[#allocation2 + $0x68] sm:$0xff]
    %v281 = vld [vmem:[#allocation2 + $0x70] sm:$0xff]
    %v282 = vld [vmem:[#allocation2 + $0x78] sm:$0xff]
    %v283 = vld [vmem:[%s2] sm:$0x1]
    %v285 = vperm.slane %v283, 0
    %v287 = vadd.f32 %v267, %v285
    %v288 = vadd.f32 %v268, %v285
    %v289 = vadd.f32 %v269, %v285
    %v290 = vadd.f32 %v270, %v285
    %v291 = vadd.f32 %v271, %v285
    %v292 = vadd.f32 %v272, %v285
    %v293 = vadd.f32 %v273, %v285
    %v294 = vadd.f32 %v274, %v285
    %v295 = vadd.f32 %v275, %v285
    %v296 = vadd.f32 %v276, %v285
    %v297 = vadd.f32 %v277, %v285
    %v298 = vadd.f32 %v278, %v285
    %v299 = vadd.f32 %v279, %v285
    %v300 = vadd.f32 %v280, %v285
    %v301 = vadd.f32 %v281, %v285
    %v302 = vadd.f32 %v282, %v285
    %vm303 = vcmp.ge.f32.partialorder %v287, 0.0
    %vm304 = vcmp.ge.f32.partialorder %v288, 0.0
    %vm305 = vcmp.ge.f32.partialorder %v289, 0.0
    %vm306 = vcmp.ge.f32.partialorder %v290, 0.0
    %vm307 = vcmp.ge.f32.partialorder %v291, 0.0
    %vm308 = vcmp.ge.f32.partialorder %v292, 0.0
    %vm309 = vcmp.ge.f32.partialorder %v293, 0.0
    %vm310 = vcmp.ge.f32.partialorder %v294, 0.0
    %vm311 = vcmp.ge.f32.partialorder %v295, 0.0
    %vm312 = vcmp.ge.f32.partialorder %v296, 0.0
    %vm313 = vcmp.ge.f32.partialorder %v297, 0.0
    %vm314 = vcmp.ge.f32.partialorder %v298, 0.0
    %vm315 = vcmp.ge.f32.partialorder %v299, 0.0
    %vm316 = vcmp.ge.f32.partialorder %v300, 0.0
    %vm317 = vcmp.ge.f32.partialorder %v301, 0.0
    %vm318 = vcmp.ge.f32.partialorder %v302, 0.0
    %v319 = vmul.f32 %v287, 0.01
    %v320 = vmul.f32 %v288, 0.01
    %v321 = vmul.f32 %v289, 0.01
    %v322 = vmul.f32 %v290, 0.01
    %v323 = vmul.f32 %v291, 0.01
    %v324 = vmul.f32 %v292, 0.01
    %v325 = vmul.f32 %v293, 0.01
    %v326 = vmul.f32 %v294, 0.01
    %v327 = vmul.f32 %v295, 0.01
    %v328 = vmul.f32 %v296, 0.01
    %v329 = vmul.f32 %v297, 0.01
    %v330 = vmul.f32 %v298, 0.01
    %v331 = vmul.f32 %v299, 0.01
    %v332 = vmul.f32 %v300, 0.01
    %v333 = vmul.f32 %v301, 0.01
    %v334 = vmul.f32 %v302, 0.01
    %v335 = vsel %vm303, %v287, %v319
    %v336 = vsel %vm304, %v288, %v320
    %v337 = vsel %vm305, %v289, %v321
    %v338 = vsel %vm306, %v290, %v322
    %v339 = vsel %vm307, %v291, %v323
    %v340 = vsel %vm308, %v292, %v324
    %v341 = vsel %vm309, %v293, %v325
    %v342 = vsel %vm310, %v294, %v326
    %v343 = vsel %vm311, %v295, %v327
    %v344 = vsel %vm312, %v296, %v328
    %v345 = vsel %vm313, %v297, %v329
    %v346 = vsel %vm314, %v298, %v330
    %v347 = vsel %vm315, %v299, %v331
    %v348 = vsel %vm316, %v300, %v332
    %v349 = vsel %vm317, %v301, %v333
    %v350 = vsel %vm318, %v302, %v334
    %v351 = vld [vmem:[%s3] sm:$0xff]
    %v352 = vld [vmem:[%s3 + $0x8] sm:$0xff]
    %v353 = vld [vmem:[%s3 + $0x10] sm:$0xff]
    %v354 = vld [vmem:[%s3 + $0x18] sm:$0xff]
    %v356 = vsel %vm247, %v335, 0
    %v359 = vsel %vm247, %v336, 0
    %v362 = vsel %vm247, %v337, 0
    %v365 = vsel %vm247, %v338, 0
    %v368 = vsel %vm247, %v339, 0
    %v371 = vsel %vm247, %v340, 0
    %v374 = vsel %vm247, %v341, 0
    %v377 = vsel %vm247, %v342, 0
    %v380 = vsel %vm247, %v343, 0
    %v383 = vsel %vm247, %v344, 0
    %v386 = vsel %vm247, %v345, 0
    %v389 = vsel %vm247, %v346, 0
    %v392 = vsel %vm247, %v347, 0
    %v395 = vsel %vm247, %v348, 0
    %v398 = vsel %vm247, %v349, 0
    %v401 = vsel %vm247, %v350, 0
    %403 = vmatpush.msra.mxu0 0.0
    %404 = vmatpush.msra.mxu0 0.0
    %405 = vmatpush.msra.mxu0 0.0
    %406 = vmatpush.msra.mxu0 0.0
    %407 = vmatpush.msra.mxu0 0.0
    %408 = vmatpush.msra.mxu0 0.0
    %409 = vmatpush.msra.mxu0 0.0
    %410 = vmatpush.msra.mxu0 0.0
    %411 = vmatpush.msra.mxu0 0.0
    %412 = vmatpush.msra.mxu0 0.0
    %413 = vmatpush.msra.mxu0 0.0
    %414 = vmatpush.msra.mxu0 0.0
    %415 = vmatpush.msra.mxu0 %v354
    %416 = vmatpush.msra.mxu0 %v353
    %417 = vmatpush.msra.mxu0 %v352
    %418 = vmatpush.msra.mxu0 %v351
    %419 = vmatmul.f32.gmra.mxu0 %v356
    %v420 = vpop.f32.mrf.mxu0
    %v421 = vadd.f32 0.0, %v420
    %422 = vmatmul.f32.gmra.mxu0 %v359
    %v423 = vpop.f32.mrf.mxu0
    %v424 = vadd.f32 0.0, %v423
    %425 = vmatmul.f32.gmra.mxu0 %v362
    %v426 = vpop.f32.mrf.mxu0
    %v427 = vadd.f32 0.0, %v426
    %428 = vmatmul.f32.gmra.mxu0 %v365
    %v429 = vpop.f32.mrf.mxu0
    %v430 = vadd.f32 0.0, %v429
    %431 = vmatmul.f32.gmra.mxu0 %v368
    %v432 = vpop.f32.mrf.mxu0
    %v433 = vadd.f32 0.0, %v432
    %434 = vmatmul.f32.gmra.mxu0 %v371
    %v435 = vpop.f32.mrf.mxu0
    %v436 = vadd.f32 0.0, %v435
    %437 = vmatmul.f32.gmra.mxu0 %v374
    %v438 = vpop.f32.mrf.mxu0
    %v439 = vadd.f32 0.0, %v438
    %440 = vmatmul.f32.gmra.mxu0 %v377
    %v441 = vpop.f32.mrf.mxu0
    %v442 = vadd.f32 0.0, %v441
    %443 = vmatmul.f32.gmra.mxu0 %v380
    %v444 = vpop.f32.mrf.mxu0
    %v445 = vadd.f32 0.0, %v444
    %446 = vmatmul.f32.gmra.mxu0 %v383
    %v447 = vpop.f32.mrf.mxu0
    %v448 = vadd.f32 0.0, %v447
    %449 = vmatmul.f32.gmra.mxu0 %v386
    %v450 = vpop.f32.mrf.mxu0
    %v451 = vadd.f32 0.0, %v450
    %452 = vmatmul.f32.gmra.mxu0 %v389
    %v453 = vpop.f32.mrf.mxu0
    %v454 = vadd.f32 0.0, %v453
    %455 = vmatmul.f32.gmra.mxu0 %v392
    %v456 = vpop.f32.mrf.mxu0
    %v457 = vadd.f32 0.0, %v456
    %458 = vmatmul.f32.gmra.mxu0 %v395
    %v459 = vpop.f32.mrf.mxu0
    %v460 = vadd.f32 0.0, %v459
    %461 = vmatmul.f32.gmra.mxu0 %v398
    %v462 = vpop.f32.mrf.mxu0
    %v463 = vadd.f32 0.0, %v462
    %464 = vmatmul.f32.gmra.mxu0 %v401
    %v465 = vpop.f32.mrf.mxu0
    %v466 = vadd.f32 0.0, %v465
    %467 = vdwg.mxu0
    %v468 = vpack.c.bf16 %v421, %v421
    %v469 = vpack.c.bf16 %v424, %v424
    %v470 = vpack.c.bf16 %v427, %v427
    %v471 = vpack.c.bf16 %v430, %v430
    %v472 = vpack.c.bf16 %v433, %v433
    %v473 = vpack.c.bf16 %v436, %v436
    %v474 = vpack.c.bf16 %v439, %v439
    %v475 = vpack.c.bf16 %v442, %v442
    %v476 = vpack.c.bf16 %v445, %v445
    %v477 = vpack.c.bf16 %v448, %v448
    %v478 = vpack.c.bf16 %v451, %v451
    %v479 = vpack.c.bf16 %v454, %v454
    %v480 = vpack.c.bf16 %v457, %v457
    %v481 = vpack.c.bf16 %v460, %v460
    %v482 = vpack.c.bf16 %v463, %v463
    %v483 = vpack.c.bf16 %v466, %v466
    %vm484 = vcmask 125952
    %485 = vst.msk [vmem:[%s4] sm:$0xf] %vm484, %v468
    %486 = vst.msk [vmem:[%s4 + $0x4] sm:$0xf] %vm484, %v469
    %487 = vst.msk [vmem:[%s4 + $0x8] sm:$0xf] %vm484, %v470
    %488 = vst.msk [vmem:[%s4 + $0xc] sm:$0xf] %vm484, %v471
    %489 = vst.msk [vmem:[%s4 + $0x10] sm:$0xf] %vm484, %v472
    %490 = vst.msk [vmem:[%s4 + $0x14] sm:$0xf] %vm484, %v473
    %491 = vst.msk [vmem:[%s4 + $0x18] sm:$0xf] %vm484, %v474
    %492 = vst.msk [vmem:[%s4 + $0x1c] sm:$0xf] %vm484, %v475
    %493 = vst.msk [vmem:[%s4 + $0x20] sm:$0xf] %vm484, %v476
    %494 = vst.msk [vmem:[%s4 + $0x24] sm:$0xf] %vm484, %v477
    %495 = vst.msk [vmem:[%s4 + $0x28] sm:$0xf] %vm484, %v478
    %496 = vst.msk [vmem:[%s4 + $0x2c] sm:$0xf] %vm484, %v479
    %497 = vst.msk [vmem:[%s4 + $0x30] sm:$0xf] %vm484, %v480
    %498 = vst.msk [vmem:[%s4 + $0x34] sm:$0xf] %vm484, %v481
    %499 = vst.msk [vmem:[%s4 + $0x38] sm:$0xf] %vm484, %v482
    %500 = vst.msk [vmem:[%s4 + $0x3c] sm:$0xf] %vm484, %v483
  $region25: #{tpu_custom_call.1} parent=0 // pred_fallthru
    _
  // Predicated region
  $region26: #{tpu_custom_call.1} parent=0 // pred_check
    _
  $region27: #{tpu_custom_call.1} parent=0 // pred_check_branch
    %502 = sbr.rel (0) target = $region29
  $region28: #{tpu_custom_call.1} parent=0 // pred_region
    _
  $region29: #{tpu_custom_call.1} parent=0 // pred_fallthru
    _
  // Predicated region
  $region30: #{tpu_custom_call.1} parent=0 // pred_check
    _
  $region31: #{tpu_custom_call.1} parent=0 // pred_check_branch
    %504 = sbr.rel (0) target = $region33
  $region32: #{tpu_custom_call.1} parent=0 // pred_region
    _
  $region33: #{tpu_custom_call.1} parent=0 // pred_fallthru
    _

</llo_original>
